<compile_context>
chip_gen: v6e
topology: v6e:2x2x1
jax: 0.10.0
libtpu: 0.0.40
codegen_flags: <defaults>
</compile_context>

<pallas_src>
import functools

import jax
import jax.numpy as jnp
from jax import lax
from jax.experimental import pallas as pl
from jax.experimental.pallas import tpu as pltpu

_LN_EPS = 1e-5
_MIB = 1024 * 1024


def _round_up(v, m):
    return (v + m - 1) // m * m


def _sublane_multiple(dtype):
    itemsize = jnp.dtype(dtype).itemsize
    if itemsize >= 4:
        return 8
    if itemsize == 2:
        return 16
    return 32


def _vmem_capacity_bytes():
    """Physical per-core VMEM; conservative fallback if the query fails."""
    try:
        info = pltpu.get_tpu_info()
        cap = int(getattr(info, "vmem_capacity_bytes", 0) or 0)
        if cap > 0:
            return cap
    except Exception:
        pass
    return 64 * _MIB  # v7x has the smallest per-core VMEM of current chips


# ----------------------------------------------------------------------------
# Kernels
# ----------------------------------------------------------------------------
def _linear_tanh_layernorm_epilogue(acc, b_ref, g_ref, be_ref, hidden_real):
    """acc: f32 [tb, hp] pre-bias matmul result.  Padded hidden lanes carry
    exact zeros (zero weight columns + zero bias -> tanh(0)=0), so single-pass
    sums over the padded axis equal sums over the real hidden axis; divide by
    the real hidden size."""
    y = acc + b_ref[...].astype(jnp.float32)
    a = jnp.tanh(y)
    inv_h = jnp.float32(1.0 / hidden_real)
    s = jnp.sum(a, axis=-1, keepdims=True)
    sq = jnp.sum(a * a, axis=-1, keepdims=True)
    mean = s * inv_h
    var = jnp.maximum(sq * inv_h - mean * mean, 0.0)  # tanh bounded -> safe
    inv_std = lax.rsqrt(var + _LN_EPS)
    return (a - mean) * inv_std * g_ref[...].astype(jnp.float32) \
        + be_ref[...].astype(jnp.float32)


def dense_kernel_resident(x_ref, w_ref, b_ref, g_ref, be_ref, o_ref, *,
                          hidden_real):
    """Weight fully VMEM-resident; one batch tile per grid step."""
    acc = jnp.dot(x_ref[...], w_ref[...], preferred_element_type=jnp.float32)
    out = _linear_tanh_layernorm_epilogue(acc, b_ref, g_ref, be_ref,
                                          hidden_real)
    o_ref[...] = out.astype(o_ref.dtype)


def dense_kernel_ktiled(x_ref, w_ref, b_ref, g_ref, be_ref, o_ref, *scratch,
                        hidden_real):
    """K-tiled path: grid=(batch_tiles, k_tiles) with f32 accumulation.
    For f32 outputs the accumulator IS the (K-resident) output block."""
    acc_ref = scratch[0] if scratch else o_ref
    k = pl.program_id(1)

    @pl.when(k == 0)
    def _():
        acc_ref[...] = jnp.zeros_like(acc_ref)

    acc_ref[...] += jnp.dot(x_ref[...], w_ref[...],
                            preferred_element_type=jnp.float32)

    @pl.when(k == pl.num_programs(1) - 1)
    def _():
        out = _linear_tanh_layernorm_epilogue(acc_ref[...], b_ref, g_ref,
                                              be_ref, hidden_real)
        o_ref[...] = out.astype(o_ref.dtype)


# ----------------------------------------------------------------------------
# Host-side wrappers
# ----------------------------------------------------------------------------
def prepare_params(weight, bias, gamma, beta):
    """One-time layout conversion (run at init, NOT per forward call):
    transpose W from PyTorch's [hidden, num_input] to [num_input, hidden],
    pad hidden to a multiple of 128 lanes, and pad the contraction axis
    either to sublane alignment (weight-resident path) or to a multiple of
    512 (K-tiled path)."""
    hidden, num_input = weight.shape
    hp = _round_up(hidden, 128)
    cap = _vmem_capacity_bytes()
    w_is = jnp.dtype(weight.dtype).itemsize

    # Weight-resident iff the whole padded weight (double-buffer accounted)
    # stays well under the per-core VMEM budget.
    kp_res = _round_up(num_input, _sublane_multiple(weight.dtype))
    resident = 2 * kp_res * hp * w_is <= int(0.40 * cap)
    # Otherwise tile K at 512 so the 256-wide MXU never runs a tk=128 tile.
    kp = kp_res if resident else _round_up(num_input, 512)

    if (kp, hp) == (num_input, hidden):
        w_t = weight.T
    else:
        w_t = jnp.zeros((kp, hp), weight.dtype).at[:num_input, :hidden].set(weight.T)
    if hp == hidden:
        b2 = bias.reshape(1, hp)
        g2 = gamma.reshape(1, hp)
        be2 = beta.reshape(1, hp)
    else:
        b2 = jnp.zeros((1, hp), bias.dtype).at[:, :hidden].set(bias)
        g2 = jnp.zeros((1, hp), gamma.dtype).at[:, :hidden].set(gamma)
        be2 = jnp.zeros((1, hp), beta.dtype).at[:, :hidden].set(beta)
    return w_t, b2, g2, be2, hidden, num_input, resident


def _pick_tb(B, align, fits):
    """Largest VMEM-fitting batch tile with a penalty on excessive padding
    and on tiny tiles (per-step overhead / weight re-streaming)."""
    b_al = _round_up(B, align)
    # Single batch tile when it fits: no padding beyond sublane alignment and
    # the weight is fetched exactly once.
    if b_al <= 1024 and fits(b_al):
        return b_al
    cands = [c for c in (1024, 512, 256, 128, 64, 32, 16, 8)
             if align <= c <= b_al and fits(c)]
    if not cands:
        return align

    def score(c):
        return _round_up(b_al, c) * (1.0 + 256.0 / c)

    return min(cands, key=score)


def dense_layer_apply(x, w_t, b2, g2, be2, hidden, num_input, resident):
    """x: [B, num_input]; params pre-transformed by prepare_params().
    Returns [B, hidden]."""
    B = x.shape[0]
    kp, hp = w_t.shape
    cap = _vmem_capacity_bytes()
    budget = int(0.70 * cap)          # headroom for compiler-internal scratch
    x_is = jnp.dtype(x.dtype).itemsize
    w_is = jnp.dtype(w_t.dtype).itemsize
    out_is = x_is                      # output dtype == x.dtype
    out_is_f32 = jnp.dtype(x.dtype) == jnp.dtype(jnp.float32)
    param_bytes = 3 * 2 * 8 * hp * jnp.dtype(b2.dtype).itemsize
    align = _sublane_multiple(x.dtype)

    if resident:
        tk = kp

        def footprint(tb):
            return (2 * tb * kp * x_is        # x (double buffered)
                    + 2 * kp * hp * w_is      # weight (constant index -> 1 DMA)
                    + 2 * tb * hp * out_is    # output
                    + param_bytes)
    else:
        # Shrink the K tile only if a single (tk, hp) weight slab cannot fit.
        tk = 512
        while tk > 128 and 2 * tk * hp * w_is > budget // 2:
            tk //= 2
        # NOTE: for extremely large hidden (hp*tb*4 ~ VMEM on v7x) the right
        # fix is to tile the hidden axis and do LayerNorm as a second pass;
        # here we only shrink tb, which covers this module's typical sizes.

        def footprint(tb):
            acc = 0 if out_is_f32 else tb * hp * 4
            return (2 * tb * tk * x_is
                    + 2 * tk * hp * w_is
                    + 2 * tb * hp * out_is
                    + acc + param_bytes)

    tb = _pick_tb(B, align, lambda t: footprint(t) <= budget)
    bp = _round_up(B, tb)

    # Pad the activation only when actually required; for aligned shapes this
    # is a no-op (no extra HBM pass over x).
    if (bp, kp) != (B, num_input):
        x_p = jnp.zeros((bp, kp), x.dtype).at[:B, :num_input].set(x)
    else:
        x_p = x

    est = footprint(tb)
    vmem_limit = int(min(cap, max(est + 16 * _MIB, 48 * _MIB)))

    if resident:
        grid = (bp // tb,)
        grid_spec = pltpu.PrefetchScalarGridSpec(
            num_scalar_prefetch=0,
            grid=grid,
            in_specs=[
                pl.BlockSpec((tb, kp), lambda i: (i, 0)),   # x tile
                pl.BlockSpec((kp, hp), lambda i: (0, 0)),   # weight (resident)
                pl.BlockSpec((1, hp), lambda i: (0, 0)),    # bias   (resident)
                pl.BlockSpec((1, hp), lambda i: (0, 0)),    # gamma  (resident)
                pl.BlockSpec((1, hp), lambda i: (0, 0)),    # beta   (resident)
            ],
            out_specs=pl.BlockSpec((tb, hp), lambda i: (i, 0)),
        )
        kernel = functools.partial(dense_kernel_resident, hidden_real=hidden)
        dims = ("parallel",)
    else:
        grid = (bp // tb, kp // tk)
        scratch = [] if out_is_f32 else [pltpu.VMEM((tb, hp), jnp.float32)]
        grid_spec = pltpu.PrefetchScalarGridSpec(
            num_scalar_prefetch=0,
            grid=grid,
            in_specs=[
                pl.BlockSpec((tb, tk), lambda i, k: (i, k)),   # x tile
                pl.BlockSpec((tk, hp), lambda i, k: (k, 0)),   # weight tile
                pl.BlockSpec((1, hp), lambda i, k: (0, 0)),    # bias
                pl.BlockSpec((1, hp), lambda i, k: (0, 0)),    # gamma
                pl.BlockSpec((1, hp), lambda i, k: (0, 0)),    # beta
            ],
            out_specs=pl.BlockSpec((tb, hp), lambda i, k: (i, 0)),
            scratch_shapes=scratch,
        )
        kernel = functools.partial(dense_kernel_ktiled, hidden_real=hidden)
        dims = ("parallel", "arbitrary")

    out_p = pl.pallas_call(
        kernel,
        out_shape=jax.ShapeDtypeStruct((bp, hp), x.dtype),
        grid_spec=grid_spec,
        compiler_params=pltpu.CompilerParams(
            dimension_semantics=dims,
            vmem_limit_bytes=vmem_limit),
    )(x_p, w_t, b2, g2, be2)

    return out_p[:B, :hidden]


def dense_layer(x, weight, bias, gamma, beta):
    """Convenience wrapper taking PyTorch-layout params (weight [hidden, in]).
    In real usage call prepare_params() once and reuse its outputs."""
    params = prepare_params(weight, bias, gamma, beta)
    return dense_layer_apply(x, *params)


def reference(x, weight, bias, gamma, beta):
    y = jnp.dot(x, weight.T, precision=lax.Precision.HIGHEST) + bias
    a = jnp.tanh(y)
    mean = jnp.mean(a, axis=-1, keepdims=True)
    var = jnp.mean((a - mean) ** 2, axis=-1, keepdims=True)
    normed = (a - mean) / jnp.sqrt(var + _LN_EPS)
    return normed * gamma + beta


if __name__ == "__main__":
    key = jax.random.PRNGKey(0)
    B, num_input, hidden = 8, 32, 32

    kx, kw, kb = jax.random.split(key, 3)
    x = jax.random.normal(kx, (B, num_input), dtype=jnp.float32)

    # nn.Linear default init: U(-1/sqrt(fan_in), 1/sqrt(fan_in))
    bound = 1.0 / (num_input ** 0.5)
    weight = jax.random.uniform(kw, (hidden, num_input), jnp.float32, -bound, bound)
    bias = jax.random.uniform(kb, (hidden,), jnp.float32, -bound, bound)
    # LayerNorm defaults: gamma=1, beta=0
    gamma = jnp.ones((hidden,), jnp.float32)
    beta = jnp.zeros((hidden,), jnp.float32)

    out = dense_layer(x, weight, bias, gamma, beta)
    out = jax.block_until_ready(out)

    ref = reference(x, weight, bias, gamma, beta)
    assert out.shape == (B, hidden)
    err = float(jnp.max(jnp.abs(out - ref)))
    assert jnp.allclose(out, ref, atol=1e-4, rtol=1e-3), err

    print("KERNEL_OK")
</pallas_src>

<mosaic_0001>
module attributes {stable_mosaic.version = 11 : i64} {
  func.func @dense_kernel_resident(%arg0: i32, %arg1: memref<8x32xf32, #tpu.memory_space<vmem>>, %arg2: memref<32x128xf32, #tpu.memory_space<vmem>>, %arg3: memref<1x128xf32, #tpu.memory_space<vmem>>, %arg4: memref<1x128xf32, #tpu.memory_space<vmem>>, %arg5: memref<1x128xf32, #tpu.memory_space<vmem>>, %arg6: memref<8x128xf32, #tpu.memory_space<vmem>>) attributes {dimension_semantics = [#tpu.dimension_semantics<parallel>], iteration_bounds = array<i64: 1>, scalar_prefetch = 0 : i64, scratch_operands = 0 : i64, tpu.core_type = #tpu.core_type<tc>, window_params = [{transform_indices = @transform_0, window_bounds = array<i64: 8, 32>}, {pipeline_mode = #tpu.pipeline_mode<synchronous>, transform_indices = @transform_1, window_bounds = array<i64: 32, 128>}, {pipeline_mode = #tpu.pipeline_mode<synchronous>, transform_indices = @transform_2, window_bounds = array<i64: 1, 128>}, {pipeline_mode = #tpu.pipeline_mode<synchronous>, transform_indices = @transform_3, window_bounds = array<i64: 1, 128>}, {pipeline_mode = #tpu.pipeline_mode<synchronous>, transform_indices = @transform_4, window_bounds = array<i64: 1, 128>}, {transform_indices = @transform_5, window_bounds = array<i64: 8, 128>}]} {
    %c0 = arith.constant 0 : index
    %c0_0 = arith.constant 0 : index
    %0 = vector.load %arg1[%c0, %c0_0] : memref<8x32xf32, #tpu.memory_space<vmem>>, vector<8x32xf32>
    %c0_1 = arith.constant 0 : index
    %c0_2 = arith.constant 0 : index
    %1 = vector.load %arg2[%c0_1, %c0_2] : memref<32x128xf32, #tpu.memory_space<vmem>>, vector<32x128xf32>
    %cst = arith.constant dense<0.000000e+00> : vector<8x128xf32>
    %2 = tpu.matmul %0, %1, %cst {dimension_numbers = #tpu.dot_dimension_numbers<[1], [0], [0], [1], [0, 0, 1, 1], [], []>} : vector<8x32xf32>, vector<32x128xf32>, vector<8x128xf32> -> vector<8x128xf32>
    %c0_3 = arith.constant 0 : index
    %c0_4 = arith.constant 0 : index
    %3 = vector.load %arg3[%c0_3, %c0_4] : memref<1x128xf32, #tpu.memory_space<vmem>>, vector<1x128xf32>
    %4 = vector.broadcast %3 : vector<1x128xf32> to vector<8x128xf32>
    %5 = arith.addf %2, %4 : vector<8x128xf32>
    %6 = math.tanh %5 : vector<8x128xf32>
    %cst_5 = arith.constant dense<0.000000e+00> : vector<8xf32>
    %7 = vector.multi_reduction <add>, %6, %cst_5 [1] : vector<8x128xf32> to vector<8xf32>
    %8 = vector.shape_cast %7 : vector<8xf32> to vector<8x1xf32>
    %9 = arith.mulf %6, %6 : vector<8x128xf32>
    %cst_6 = arith.constant dense<0.000000e+00> : vector<8xf32>
    %10 = vector.multi_reduction <add>, %9, %cst_6 [1] : vector<8x128xf32> to vector<8xf32>
    %11 = vector.shape_cast %10 : vector<8xf32> to vector<8x1xf32>
    %cst_7 = arith.constant 3.125000e-02 : f32
    %12 = vector.broadcast %cst_7 : f32 to vector<8x1xf32>
    %13 = arith.mulf %8, %12 : vector<8x1xf32>
    %cst_8 = arith.constant 3.125000e-02 : f32
    %14 = vector.broadcast %cst_8 : f32 to vector<8x1xf32>
    %15 = arith.mulf %11, %14 : vector<8x1xf32>
    %16 = arith.mulf %13, %13 : vector<8x1xf32>
    %17 = arith.subf %15, %16 : vector<8x1xf32>
    %cst_9 = arith.constant 0.000000e+00 : f32
    %18 = vector.broadcast %cst_9 : f32 to vector<8x1xf32>
    %19 = arith.maximumf %17, %18 : vector<8x1xf32>
    %cst_10 = arith.constant 9.99999974E-6 : f32
    %20 = vector.broadcast %cst_10 : f32 to vector<8x1xf32>
    %21 = arith.addf %19, %20 : vector<8x1xf32>
    %22 = math.rsqrt %21 : vector<8x1xf32>
    %23 = vector.broadcast %13 : vector<8x1xf32> to vector<8x128xf32>
    %24 = arith.subf %6, %23 : vector<8x128xf32>
    %25 = vector.broadcast %22 : vector<8x1xf32> to vector<8x128xf32>
    %26 = arith.mulf %24, %25 : vector<8x128xf32>
    %c0_11 = arith.constant 0 : index
    %c0_12 = arith.constant 0 : index
    %27 = vector.load %arg4[%c0_11, %c0_12] : memref<1x128xf32, #tpu.memory_space<vmem>>, vector<1x128xf32>
    %28 = vector.broadcast %27 : vector<1x128xf32> to vector<8x128xf32>
    %29 = arith.mulf %26, %28 : vector<8x128xf32>
    %c0_13 = arith.constant 0 : index
    %c0_14 = arith.constant 0 : index
    %30 = vector.load %arg5[%c0_13, %c0_14] : memref<1x128xf32, #tpu.memory_space<vmem>>, vector<1x128xf32>
    %31 = vector.broadcast %30 : vector<1x128xf32> to vector<8x128xf32>
    %32 = arith.addf %29, %31 : vector<8x128xf32>
    %c0_15 = arith.constant 0 : index
    %c0_16 = arith.constant 0 : index
    %33 = vector.load %arg6[%c0_15, %c0_16] : memref<8x128xf32, #tpu.memory_space<vmem>>, vector<8x128xf32>
    tpu.vector_store %arg6[%c0_15, %c0_16], %32 {strides = array<i32>} : memref<8x128xf32, #tpu.memory_space<vmem>>, vector<8x128xf32>,
    return
  }
  func.func @transform_0(%arg0: i32) -> (i32, i32) {
    %c0_i32 = arith.constant 0 : i32
    %c0_i32_0 = arith.constant 0 : i32
    return %arg0, %c0_i32 : i32, i32
  }
  func.func @transform_1(%arg0: i32) -> (i32, i32) {
    %c0_i32 = arith.constant 0 : i32
    %c0_i32_0 = arith.constant 0 : i32
    %c0_i32_1 = arith.constant 0 : i32
    return %c0_i32, %c0_i32_0 : i32, i32
  }
  func.func @transform_2(%arg0: i32) -> (i32, i32) {
    %c0_i32 = arith.constant 0 : i32
    %c0_i32_0 = arith.constant 0 : i32
    %c0_i32_1 = arith.constant 0 : i32
    return %c0_i32, %c0_i32_0 : i32, i32
  }
  func.func @transform_3(%arg0: i32) -> (i32, i32) {
    %c0_i32 = arith.constant 0 : i32
    %c0_i32_0 = arith.constant 0 : i32
    %c0_i32_1 = arith.constant 0 : i32
    return %c0_i32, %c0_i32_0 : i32, i32
  }
  func.func @transform_4(%arg0: i32) -> (i32, i32) {
    %c0_i32 = arith.constant 0 : i32
    %c0_i32_0 = arith.constant 0 : i32
    %c0_i32_1 = arith.constant 0 : i32
    return %c0_i32, %c0_i32_0 : i32, i32
  }
  func.func @transform_5(%arg0: i32) -> (i32, i32) {
    %c0_i32 = arith.constant 0 : i32
    %c0_i32_0 = arith.constant 0 : i32
    return %arg0, %c0_i32 : i32, i32
  }
}

</mosaic_0001>

<llo_original>
// kernel: tpu_custom_call.1
$region0: #{tpu_custom_call.1}
  #allocation0 [shape = 'u32[]', space=smem, size = 0x4, offset = 0x4, fixed_abs, tag = 'smem constant byte address 0x4 - core index']
  #allocation1 [shape = 'u32[144,128]{1,0:T(1,128)}', space=vmem, size = 0x12000, scoped, tag = 'internal scratch']
  %s0 = inlined_call_operand.hbm [shape: f32[8,32], index: 0, kind: input, shape index: {}]
  %s1 = inlined_call_operand.hbm [shape: f32[32,128], index: 1, kind: input, shape index: {}]
  %s2 = inlined_call_operand.vmem [shape: f32[1,128], index: 2, kind: input, shape index: {}]
  %s3 = inlined_call_operand.vmem [shape: f32[1,128], index: 3, kind: input, shape index: {}]
  %s4 = inlined_call_operand.vmem [shape: f32[1,128], index: 4, kind: input, shape index: {}]
  %s5 = inlined_call_operand.hbm [shape: f32[8,128], index: 5, kind: output, shape index: {}]
  %s6 = sld [smem:[#allocation0]]
  $region38: #{tpu_custom_call.1} parent=0
    _
  %s8 = ssub.s32 1, %s6
  %s9 = scalar_select 0, %s8, %s6
  $region1: #{tpu_custom_call.1} parent=0
    #allocation2 [shape = 'u8[4096]{0}', space=vmem, size = 0x1000, scoped, tag = 'input window, operand 0, single buffered']
    #allocation3 [shape = 's32[1]{0}', space=sflag, size = 0x4, scoped, tag = 'scoped memory for tpu_custom_call.1']
    #allocation4 [shape = 's32[1]{0}', space=sflag, size = 0x4, scoped, tag = 'scoped memory for tpu_custom_call.1']
    #allocation5 [shape = 'u8[16384]{0}', space=vmem, size = 0x4000, scoped, tag = 'input window, operand 1, single buffered']
    #allocation6 [shape = 's32[1]{0}', space=sflag, size = 0x4, scoped, tag = 'scoped memory for tpu_custom_call.1']
    #allocation7 [shape = 'u8[4096]{0}', space=vmem, size = 0x1000, scoped, tag = 'output window, operand 0, single buffered']
    %10 = vsyncpa [#allocation3], 0
    %11 = vsyncpa [#allocation6], 0
    %12 = vsyncpa [#allocation4], 0
    // Predicated region
    $region2: #{tpu_custom_call.1} parent=1 // pred_check
      _
    $region3: #{tpu_custom_call.1} parent=1 // pred_check_branch
      %14 = sbr.rel (0) target = $region5
    $region4: #{tpu_custom_call.1} parent=1 // pred_region
      %s16 = ssub.s32 128, 128
      %17 = vsyncadd [#allocation3], %s16
      %s19 = sshll.u32 [#allocation2], 4
      %s20 = int_to_ptr.vmem [resolvable:$true] %s19
      %22 = dma.hbm_to_vmem [thread:$0]  %s0, 128, %s20, [#allocation3]
    $region5: #{tpu_custom_call.1} parent=1 // pred_fallthru
      _
    // Predicated region
    $region6: #{tpu_custom_call.1} parent=1 // pred_check
      _
    $region7: #{tpu_custom_call.1} parent=1 // pred_check_branch
      %24 = sbr.rel (0) target = $region9
    $region8: #{tpu_custom_call.1} parent=1 // pred_region
      %s26 = ssub.s32 512, 512
      %27 = vsyncadd [#allocation6], %s26
      %s28 = sshll.u32 [#allocation5], 4
      %s29 = int_to_ptr.vmem [resolvable:$true] %s28
      %34 = dma.hbm_to_vmem [thread:$0]  %s1, 512, %s29, [#allocation6], 128, 128, 8
    $region9: #{tpu_custom_call.1} parent=1 // pred_fallthru
      _
    // Predicated region
    $region10: #{tpu_custom_call.1} parent=1 // pred_check
      _
    $region11: #{tpu_custom_call.1} parent=1 // pred_check_branch
      %36 = sbr.rel (0) target = $region13
    $region12: #{tpu_custom_call.1} parent=1 // pred_region
      _
    $region13: #{tpu_custom_call.1} parent=1 // pred_fallthru
      _
    // Predicated region
    $region14: #{tpu_custom_call.1} parent=1 // pred_check
      _
    $region15: #{tpu_custom_call.1} parent=1 // pred_check_branch
      %38 = sbr.rel (0) target = $region17
    $region16: #{tpu_custom_call.1} parent=1 // pred_region
      _
    $region17: #{tpu_custom_call.1} parent=1 // pred_fallthru
      _
    // Predicated region
    $region18: #{tpu_custom_call.1} parent=1 // pred_check
      _
    $region19: #{tpu_custom_call.1} parent=1 // pred_check_branch
      %40 = sbr.rel (0) target = $region21
    $region20: #{tpu_custom_call.1} parent=1 // pred_region
      _
    $region21: #{tpu_custom_call.1} parent=1 // pred_fallthru
      _
    // Predicated region
    $region22: #{tpu_custom_call.1} parent=1 // pred_check
      _
    $region23: #{tpu_custom_call.1} parent=1 // pred_check_branch
      %42 = sbr.rel (0) target = $region25
    $region24: #{tpu_custom_call.1} parent=1 // pred_region
      %43 = dma.done [#allocation3], 128
    $region25: #{tpu_custom_call.1} parent=1 // pred_fallthru
      _
    // Predicated region
    $region26: #{tpu_custom_call.1} parent=1 // pred_check
      _
    $region27: #{tpu_custom_call.1} parent=1 // pred_check_branch
      %45 = sbr.rel (0) target = $region29
    $region28: #{tpu_custom_call.1} parent=1 // pred_region
      %46 = dma.done [#allocation6], 512
    $region29: #{tpu_custom_call.1} parent=1 // pred_fallthru
      _
    %v47 = vld [vmem:[#allocation2] sm:$0xff]
    %v48 = vld [vmem:[#allocation5] sm:$0xff]
    %v49 = vld [vmem:[#allocation5 + $0x8] sm:$0xff]
    %v50 = vld [vmem:[#allocation5 + $0x10] sm:$0xff]
    %v51 = vld [vmem:[#allocation5 + $0x18] sm:$0xff]
    %v52 = vld [vmem:[%s2] sm:$0x1]
    %v54 = vlaneseq
    %v55 = vshrl.u32 %v54, 7
    %v56 = vsub.s32 0, %v55
    %v57 = vrot.slane %v52, %v56
    %vm59 = vcmask 261120
    %v61 = vsel %vm59, %v47, 0
    %63 = vmatprep.subr.mxu0 0.0
    %64 = vmatpush1.msra.mxu0 0.0
    %65 = vmatprep.subr.mxu0 0.0
    %66 = vmatpush1.msra.mxu0 0.0
    %67 = vmatprep.subr.mxu0 0.0
    %68 = vmatpush1.msra.mxu0 0.0
    %69 = vmatprep.subr.mxu0 0.0
    %70 = vmatpush1.msra.mxu0 0.0
    %71 = vmatprep.subr.mxu0 0.0
    %72 = vmatpush1.msra.mxu0 0.0
    %73 = vmatprep.subr.mxu0 0.0
    %74 = vmatpush1.msra.mxu0 0.0
    %75 = vmatprep.subr.mxu0 0.0
    %76 = vmatpush1.msra.mxu0 0.0
    %77 = vmatprep.subr.mxu0 0.0
    %78 = vmatpush1.msra.mxu0 0.0
    %79 = vmatprep.subr.mxu0 0.0
    %80 = vmatpush1.msra.mxu0 0.0
    %81 = vmatprep.subr.mxu0 0.0
    %82 = vmatpush1.msra.mxu0 0.0
    %83 = vmatprep.subr.mxu0 0.0
    %84 = vmatpush1.msra.mxu0 0.0
    %85 = vmatprep.subr.mxu0 0.0
    %86 = vmatpush1.msra.mxu0 0.0
    %87 = vmatprep.subr.mxu0 0.0
    %88 = vmatpush1.msra.mxu0 %v51
    %89 = vmatprep.subr.mxu0 0.0
    %90 = vmatpush1.msra.mxu0 %v50
    %91 = vmatprep.subr.mxu0 0.0
    %92 = vmatpush1.msra.mxu0 %v49
    %93 = vmatprep.subr.mxu0 0.0
    %94 = vmatpush1.msra.mxu0 %v48
    %95 = vmatprep.subr.mxu0 0.0
    %96 = vmatpush2.msra.mxu0 0.0
    %97 = vmatprep.subr.mxu0 0.0
    %98 = vmatpush2.msra.mxu0 0.0
    %99 = vmatprep.subr.mxu0 0.0
    %100 = vmatpush2.msra.mxu0 0.0
    %101 = vmatprep.subr.mxu0 0.0
    %102 = vmatpush2.msra.mxu0 0.0
    %103 = vmatprep.subr.mxu0 0.0
    %104 = vmatpush2.msra.mxu0 0.0
    %105 = vmatprep.subr.mxu0 0.0
    %106 = vmatpush2.msra.mxu0 0.0
    %107 = vmatprep.subr.mxu0 0.0
    %108 = vmatpush2.msra.mxu0 0.0
    %109 = vmatprep.subr.mxu0 0.0
    %110 = vmatpush2.msra.mxu0 0.0
    %111 = vmatprep.subr.mxu0 0.0
    %112 = vmatpush2.msra.mxu0 0.0
    %113 = vmatprep.subr.mxu0 0.0
    %114 = vmatpush2.msra.mxu0 0.0
    %115 = vmatprep.subr.mxu0 0.0
    %116 = vmatpush2.msra.mxu0 0.0
    %117 = vmatprep.subr.mxu0 0.0
    %118 = vmatpush2.msra.mxu0 0.0
    %119 = vmatprep.subr.mxu0 0.0
    %120 = vmatpush2.msra.mxu0 0.0
    %121 = vmatprep.subr.mxu0 0.0
    %122 = vmatpush2.msra.mxu0 0.0
    %123 = vmatprep.subr.mxu0 0.0
    %124 = vmatpush2.msra.mxu0 0.0
    %125 = vmatprep.subr.mxu0 0.0
    %126 = vmatpush2.msra.mxu0 0.0
    %127 = vmatprep.mubr.f32.mxu0 0.0
    %128 = vmatmul.mubr.f32.gmra.mxu0 %v61
    %v129 = vpop.f32.mrf.mxu0
    %v130 = vadd.f32 %v57, %v129
    %v131 = vpop.f32.mrf.mxu0
    %132 = vdwg.mxu0
    %v133 = vtanh.pop %v130
    %134 = vadd.xlane.f32.xlu0 %v133
    %v135 = vpop.xlane.xlu0 %134
    %v136 = vmul.f32 %v133, %v133
    %137 = vadd.xlane.f32.xlu0 %v136
    %v138 = vpop.xlane.xlu0 %137
    %v139 = vmul.f32 %v135, 0.03125
    %v140 = vmul.f32 %v138, 0.03125
    %v141 = vmul.f32 %v139, %v139
    %v142 = vsub.f32 %v140, %v141
    %v143 = vmax.f32 %v142, 0.0
    %v144 = vadd.f32 %v143, 1e-05
    %v145 = vrsqrt.pop %v144
    %v146 = vsub.f32 %v133, %v139
    %v147 = vmul.f32 %v146, %v145
    %v148 = vld [vmem:[%s3] sm:$0x1]
    %v150 = vlaneseq
    %v151 = vshrl.u32 %v150, 7
    %v152 = vsub.s32 0, %v151
    %v153 = vrot.slane %v148, %v152
    %v155 = vmul.f32 %v147, %v153
    %v156 = vld [vmem:[%s4] sm:$0x1]
    %v158 = vlaneseq
    %v159 = vshrl.u32 %v158, 7
    %v160 = vsub.s32 0, %v159
    %v161 = vrot.slane %v156, %v160
    %v163 = vadd.f32 %v155, %v161
    %164 = vst [vmem:[#allocation7] sm:$0xff] %v163
    // Predicated region
    $region30: #{tpu_custom_call.1} parent=1 // pred_check
      _
    $region31: #{tpu_custom_call.1} parent=1 // pred_check_branch
      %166 = sbr.rel (0) target = $region33
    $region32: #{tpu_custom_call.1} parent=1 // pred_region
      %s168 = ssub.s32 128, 128
      %169 = vsyncadd [#allocation4], %s168
      %s171 = sshll.u32 [#allocation7], 4
      %s172 = int_to_ptr.vmem [resolvable:$true] %s171
      %174 = dma.vmem_to_hbm [thread:$0]  %s172, 128, %s5, [#allocation4]
    $region33: #{tpu_custom_call.1} parent=1 // pred_fallthru
      _
    // Predicated region
    $region34: #{tpu_custom_call.1} parent=1 // pred_check
      _
    $region35: #{tpu_custom_call.1} parent=1 // pred_check_branch
      %176 = sbr.rel (0) target = $region37
    $region36: #{tpu_custom_call.1} parent=1 // pred_region
      %177 = dma.done [#allocation4], 128
    $region37: #{tpu_custom_call.1} parent=1 // pred_fallthru
      _
    %178 = vsyncpa [#allocation3], 1
    %179 = vsyncpa [#allocation6], 1
    %180 = vsyncpa [#allocation4], 1

</llo_original>
